<compile_context>
chip_gen: v7x
topology: tpu7x:2x2x1
jax: 0.10.0
libtpu: 0.0.40
codegen_flags: <defaults>
</compile_context>

<pallas_src>
import functools

import jax
import jax.numpy as jnp
from jax.experimental import pallas as pl
from jax.experimental.pallas import tpu as pltpu

HIDDEN = 128


def _round_up(x: int, m: int) -> int:
    return ((x + m - 1) // m) * m


# --------------------------------------------------------------------------- #
# Kernel
# --------------------------------------------------------------------------- #
def _mlp_kernel(z_ref, w1_ref, b1_ref, w2_ref, b2_ref, w3_ref, b3_ref,
                out_ref, h2_ref):
    """Grid = (batch blocks, output-column blocks).

    Layers 1-2 run once per batch block (n == 0) and the bf16 h2 activation is
    cached in VMEM scratch; every n-step only runs the layer-3 matmul against
    its (HIDDEN, TN) slice of w3.
    """
    @pl.when(pl.program_id(1) == 0)
    def _():
        z = z_ref[...].astype(jnp.bfloat16)            # cast in-kernel, no wrapper pass
        h1 = jnp.dot(z, w1_ref[...], preferred_element_type=jnp.float32)
        h1 = jnp.maximum(h1 + b1_ref[...], 0.0)
        h2 = jnp.dot(h1.astype(jnp.bfloat16), w2_ref[...],
                     preferred_element_type=jnp.float32)
        h2 = jnp.maximum(h2 + b2_ref[...], 0.0)
        h2_ref[...] = h2.astype(jnp.bfloat16)

    out = jnp.dot(h2_ref[...], w3_ref[...], preferred_element_type=jnp.float32)
    out_ref[...] = (out + b3_ref[...]).astype(out_ref.dtype)


# --------------------------------------------------------------------------- #
# Tile selection (generation-aware VMEM budget)
# --------------------------------------------------------------------------- #
def _vmem_capacity_bytes() -> int:
    try:
        return int(pltpu.get_tpu_info().vmem_capacity_bytes)
    except Exception:
        return 64 << 20  # conservative fallback: v7x per-TensorCore VMEM


def _choose_tiles(B: int, L: int, D: int, out_itemsize: int):
    """Pick (TB, TN, vmem_limit_bytes). All footprints count Pallas's x2 buffering."""
    bf16, f32 = 2, 4
    cap = _vmem_capacity_bytes()
    budget = int(cap * 0.55)  # headroom for compiler-internal scratch / semaphores

    # Column tile: one full-width block for modest D (masked store handles D % 128),
    # otherwise 128-aligned 512-wide blocks so w3/out stay bounded on v7x.
    tn = D if D <= 1024 else 512

    fixed = 2 * (L * HIDDEN * bf16 + HIDDEN * f32          # w1, b1
                 + HIDDEN * HIDDEN * bf16 + HIDDEN * f32)   # w2, b2
    per_n = 2 * (HIDDEN * tn * bf16 + tn * f32)             # w3, b3 column blocks

    def footprint(tb):
        streams = 2 * tb * L * f32 + 2 * tb * tn * out_itemsize   # z in, out (x2 bufs)
        scratch = tb * HIDDEN * bf16                              # h2 cache
        live = tb * (2 * HIDDEN * f32 + L * bf16) + tb * tn * f32  # in-flight temps
        return fixed + per_n + streams + scratch + live

    tb_cap = min(2048, _round_up(B, 8))
    tb = 8
    for cand in (2048, 1024, 512, 256, 128, 64, 32, 16, 8):
        if cand > tb_cap:
            continue
        if footprint(cand) <= budget:
            tb = cand
            break

    vmem_limit = min(int(cap * 0.85), max(footprint(tb) + (8 << 20), 32 << 20))
    return tb, tn, int(vmem_limit)


# --------------------------------------------------------------------------- #
# Wrapper
# --------------------------------------------------------------------------- #
@functools.partial(jax.jit, static_argnames=("out_dtype",))
def embed_reconstructor_forward(z, params, out_dtype=jnp.bfloat16):
    """Fused forward pass of EmbedReconstructor.

    z:      (B, latent_dim) float32
    params: dict with w1 (L,128), b1 (1,128), w2 (128,128), b2 (1,128),
            w3 (128,D), b3 (1,D)   -- weights stored as (in, out).
    returns (B, D) in `out_dtype` (default bf16 to halve HBM writeback).
    """
    w1, b1 = params["w1"], params["b1"]
    w2, b2 = params["w2"], params["b2"]
    w3, b3 = params["w3"], params["b3"]

    B, L = z.shape
    D = w3.shape[1]
    out_itemsize = jnp.dtype(out_dtype).itemsize

    tb, tn, vmem_limit = _choose_tiles(B, L, D, out_itemsize)
    nb = pl.cdiv(B, tb)
    nn = pl.cdiv(D, tn)

    # Weights to bf16 (MXU operands), biases to f32 (epilogue). These are tiny
    # parameter-sized casts; the big activation streams (z, out) are untouched.
    w1_bf, w2_bf, w3_bf = (w.astype(jnp.bfloat16) for w in (w1, w2, w3))
    b1_f, b2_f, b3_f = (b.astype(jnp.float32) for b in (b1, b2, b3))

    resident = lambda shape: pl.BlockSpec(shape, lambda i, n: (0, 0))

    flops = 2 * B * (L * HIDDEN + HIDDEN * HIDDEN + HIDDEN * D)
    bytes_accessed = (
        B * L * z.dtype.itemsize                                   # z read
        + (L * HIDDEN + HIDDEN * HIDDEN + HIDDEN * D) * 2          # bf16 weights
        + (2 * HIDDEN + D) * 4                                     # f32 biases
        + B * D * out_itemsize                                     # output write
    )

    out = pl.pallas_call(
        _mlp_kernel,
        out_shape=jax.ShapeDtypeStruct((B, D), out_dtype),
        grid_spec=pltpu.PrefetchScalarGridSpec(
            num_scalar_prefetch=0,
            grid=(nb, nn),
            in_specs=[
                pl.BlockSpec((tb, L), lambda i, n: (i, 0)),         # z: streamed f32 tiles
                resident((L, HIDDEN)), resident((1, HIDDEN)),        # w1, b1 resident
                resident((HIDDEN, HIDDEN)), resident((1, HIDDEN)),   # w2, b2 resident
                pl.BlockSpec((HIDDEN, tn), lambda i, n: (0, n)),     # w3 column block
                pl.BlockSpec((1, tn), lambda i, n: (0, n)),          # b3 column block
            ],
            out_specs=pl.BlockSpec((tb, tn), lambda i, n: (i, n)),
            scratch_shapes=[pltpu.VMEM((tb, HIDDEN), jnp.bfloat16)],  # h2 cache
        ),
        compiler_params=pltpu.CompilerParams(
            dimension_semantics=("parallel", "arbitrary"),
            vmem_limit_bytes=vmem_limit,
        ),
        cost_estimate=pl.CostEstimate(
            flops=int(flops), transcendentals=0, bytes_accessed=int(bytes_accessed)),
    )(z, w1_bf, b1_f, w2_bf, b2_f, w3_bf, b3_f)

    return out


# --------------------------------------------------------------------------- #
# Parameters + references
# --------------------------------------------------------------------------- #
def init_params(key, latent_dim, input_dim, hidden=HIDDEN):
    """Deterministic synthetic parameters (Kaiming-uniform-ish like nn.Linear default)."""
    ks = jax.random.split(key, 6)

    def linear(kw, kb, fan_in, fan_out):
        bound = 1.0 / jnp.sqrt(float(fan_in))
        w = jax.random.uniform(kw, (fan_in, fan_out), jnp.float32, -bound, bound)
        b = jax.random.uniform(kb, (1, fan_out), jnp.float32, -bound, bound)
        return w, b

    w1, b1 = linear(ks[0], ks[1], latent_dim, hidden)
    w2, b2 = linear(ks[2], ks[3], hidden, hidden)
    w3, b3 = linear(ks[4], ks[5], hidden, input_dim)
    return {"w1": w1, "b1": b1, "w2": w2, "b2": b2, "w3": w3, "b3": b3}


def _reference_forward_f32(z, p):
    h1 = jnp.maximum(z @ p["w1"] + p["b1"], 0.0)
    h2 = jnp.maximum(h1 @ p["w2"] + p["b2"], 0.0)
    return h2 @ p["w3"] + p["b3"]


def _reference_forward_bf16(z, p):
    """Same mixed precision as the kernel (bf16 operands, f32 accumulate)."""
    f32, bf = jnp.float32, jnp.bfloat16
    h1 = jnp.dot(z.astype(bf), p["w1"].astype(bf), preferred_element_type=f32)
    h1 = jnp.maximum(h1 + p["b1"], 0.0)
    h2 = jnp.dot(h1.astype(bf), p["w2"].astype(bf), preferred_element_type=f32)
    h2 = jnp.maximum(h2 + p["b2"], 0.0)
    out = jnp.dot(h2.astype(bf), p["w3"].astype(bf), preferred_element_type=f32)
    return out + p["b3"]


if __name__ == "__main__":
    key = jax.random.PRNGKey(0)
    k_z, k_p = jax.random.split(key)

    batch = 8
    latent_dim = 32
    input_dim = 64

    z = jax.random.normal(k_z, (batch, latent_dim), jnp.float32)
    params = init_params(k_p, latent_dim, input_dim)

    # f32-output path: tight check vs identically-cast reference.
    out_f32 = jax.block_until_ready(
        embed_reconstructor_forward(z, params, out_dtype=jnp.float32))
    # default bf16-output path (half the HBM writeback).
    out_bf16 = jax.block_until_ready(embed_reconstructor_forward(z, params))

    ref_mixed = _reference_forward_bf16(z, params)
    ref_f32 = _reference_forward_f32(z, params)

    assert out_f32.shape == (batch, input_dim) and out_f32.dtype == jnp.float32
    assert out_bf16.shape == (batch, input_dim) and out_bf16.dtype == jnp.bfloat16
    assert jnp.allclose(out_f32, ref_mixed, atol=2e-3, rtol=2e-3)
    assert jnp.allclose(out_f32, ref_f32, atol=5e-2, rtol=5e-2)
    assert jnp.allclose(out_bf16.astype(jnp.float32), ref_mixed, atol=1e-2, rtol=1e-2)

    print("KERNEL_OK")
</pallas_src>

<mosaic_0001>
module attributes {stable_mosaic.version = 11 : i64} {
  func.func @_mlp_kernel(%arg0: i32, %arg1: i32, %arg2: memref<8x32xf32, #tpu.memory_space<vmem>>, %arg3: memref<32x128xbf16, #tpu.memory_space<vmem>>, %arg4: memref<1x128xf32, #tpu.memory_space<vmem>>, %arg5: memref<128x128xbf16, #tpu.memory_space<vmem>>, %arg6: memref<1x128xf32, #tpu.memory_space<vmem>>, %arg7: memref<128x64xbf16, #tpu.memory_space<vmem>>, %arg8: memref<1x64xf32, #tpu.memory_space<vmem>>, %arg9: memref<8x64xf32, #tpu.memory_space<vmem>>, %arg10: memref<8x128xbf16, #tpu.memory_space<vmem>>) attributes {dimension_semantics = [#tpu.dimension_semantics<parallel>, #tpu.dimension_semantics<arbitrary>], iteration_bounds = array<i64: 1, 1>, scalar_prefetch = 0 : i64, scratch_operands = 1 : i64, tpu.core_type = #tpu.core_type<tc>, window_params = [{transform_indices = @transform_0, window_bounds = array<i64: 8, 32>}, {pipeline_mode = #tpu.pipeline_mode<synchronous>, transform_indices = @transform_1, window_bounds = array<i64: 32, 128>}, {pipeline_mode = #tpu.pipeline_mode<synchronous>, transform_indices = @transform_2, window_bounds = array<i64: 1, 128>}, {pipeline_mode = #tpu.pipeline_mode<synchronous>, transform_indices = @transform_3, window_bounds = array<i64: 128, 128>}, {pipeline_mode = #tpu.pipeline_mode<synchronous>, transform_indices = @transform_4, window_bounds = array<i64: 1, 128>}, {transform_indices = @transform_5, window_bounds = array<i64: 128, 64>}, {transform_indices = @transform_6, window_bounds = array<i64: 1, 64>}, {transform_indices = @transform_7, window_bounds = array<i64: 8, 64>}]} {
    %c0_i32 = arith.constant 0 : i32
    %0 = arith.cmpi eq, %arg1, %c0_i32 : i32
    %1 = arith.extui %0 : i1 to i32
    %c0_i32_0 = arith.constant 0 : i32
    %2 = arith.cmpi ne, %1, %c0_i32_0 : i32
    scf.if %2 {
      %c0_8 = arith.constant 0 : index
      %c0_9 = arith.constant 0 : index
      %10 = vector.load %arg2[%c0_8, %c0_9] : memref<8x32xf32, #tpu.memory_space<vmem>>, vector<8x32xf32>
      %11 = arith.truncf %10 : vector<8x32xf32> to vector<8x32xbf16>
      %c0_10 = arith.constant 0 : index
      %c0_11 = arith.constant 0 : index
      %12 = vector.load %arg3[%c0_10, %c0_11] : memref<32x128xbf16, #tpu.memory_space<vmem>>, vector<32x128xbf16>
      %cst_12 = arith.constant dense<0.000000e+00> : vector<8x128xf32>
      %13 = tpu.matmul %11, %12, %cst_12 {dimension_numbers = #tpu.dot_dimension_numbers<[1], [0], [0], [1], [0, 0, 1, 1], [], []>} : vector<8x32xbf16>, vector<32x128xbf16>, vector<8x128xf32> -> vector<8x128xf32>
      %c0_13 = arith.constant 0 : index
      %c0_14 = arith.constant 0 : index
      %14 = vector.load %arg4[%c0_13, %c0_14] : memref<1x128xf32, #tpu.memory_space<vmem>>, vector<1x128xf32>
      %15 = vector.broadcast %14 : vector<1x128xf32> to vector<8x128xf32>
      %16 = arith.addf %13, %15 : vector<8x128xf32>
      %cst_15 = arith.constant 0.000000e+00 : f32
      %17 = vector.broadcast %cst_15 : f32 to vector<8x128xf32>
      %18 = arith.maximumf %16, %17 : vector<8x128xf32>
      %19 = arith.truncf %18 : vector<8x128xf32> to vector<8x128xbf16>
      %c0_16 = arith.constant 0 : index
      %c0_17 = arith.constant 0 : index
      %20 = vector.load %arg5[%c0_16, %c0_17] : memref<128x128xbf16, #tpu.memory_space<vmem>>, vector<128x128xbf16>
      %cst_18 = arith.constant dense<0.000000e+00> : vector<8x128xf32>
      %21 = tpu.matmul %19, %20, %cst_18 {dimension_numbers = #tpu.dot_dimension_numbers<[1], [0], [0], [1], [0, 0, 1, 1], [], []>} : vector<8x128xbf16>, vector<128x128xbf16>, vector<8x128xf32> -> vector<8x128xf32>
      %c0_19 = arith.constant 0 : index
      %c0_20 = arith.constant 0 : index
      %22 = vector.load %arg6[%c0_19, %c0_20] : memref<1x128xf32, #tpu.memory_space<vmem>>, vector<1x128xf32>
      %23 = vector.broadcast %22 : vector<1x128xf32> to vector<8x128xf32>
      %24 = arith.addf %21, %23 : vector<8x128xf32>
      %cst_21 = arith.constant 0.000000e+00 : f32
      %25 = vector.broadcast %cst_21 : f32 to vector<8x128xf32>
      %26 = arith.maximumf %24, %25 : vector<8x128xf32>
      %27 = arith.truncf %26 : vector<8x128xf32> to vector<8x128xbf16>
      %c0_22 = arith.constant 0 : index
      %c0_23 = arith.constant 0 : index
      %28 = vector.load %arg10[%c0_22, %c0_23] : memref<8x128xbf16, #tpu.memory_space<vmem>>, vector<8x128xbf16>
      tpu.vector_store %arg10[%c0_22, %c0_23], %27 {strides = array<i32>} : memref<8x128xbf16, #tpu.memory_space<vmem>>, vector<8x128xbf16>,
    } else {
    }
    %c0 = arith.constant 0 : index
    %c0_1 = arith.constant 0 : index
    %3 = vector.load %arg10[%c0, %c0_1] : memref<8x128xbf16, #tpu.memory_space<vmem>>, vector<8x128xbf16>
    %c0_2 = arith.constant 0 : index
    %c0_3 = arith.constant 0 : index
    %4 = vector.load %arg7[%c0_2, %c0_3] : memref<128x64xbf16, #tpu.memory_space<vmem>>, vector<128x64xbf16>
    %cst = arith.constant dense<0.000000e+00> : vector<8x64xf32>
    %5 = tpu.matmul %3, %4, %cst {dimension_numbers = #tpu.dot_dimension_numbers<[1], [0], [0], [1], [0, 0, 1, 1], [], []>} : vector<8x128xbf16>, vector<128x64xbf16>, vector<8x64xf32> -> vector<8x64xf32>
    %c0_4 = arith.constant 0 : index
    %c0_5 = arith.constant 0 : index
    %6 = vector.load %arg8[%c0_4, %c0_5] : memref<1x64xf32, #tpu.memory_space<vmem>>, vector<1x64xf32>
    %7 = vector.broadcast %6 : vector<1x64xf32> to vector<8x64xf32>
    %8 = arith.addf %5, %7 : vector<8x64xf32>
    %c0_6 = arith.constant 0 : index
    %c0_7 = arith.constant 0 : index
    %9 = vector.load %arg9[%c0_6, %c0_7] : memref<8x64xf32, #tpu.memory_space<vmem>>, vector<8x64xf32>
    tpu.vector_store %arg9[%c0_6, %c0_7], %8 {strides = array<i32>} : memref<8x64xf32, #tpu.memory_space<vmem>>, vector<8x64xf32>,
    return
  }
  func.func @transform_0(%arg0: i32, %arg1: i32) -> (i32, i32) {
    %c0_i32 = arith.constant 0 : i32
    %c0_i32_0 = arith.constant 0 : i32
    return %arg0, %c0_i32 : i32, i32
  }
  func.func @transform_1(%arg0: i32, %arg1: i32) -> (i32, i32) {
    %c0_i32 = arith.constant 0 : i32
    %c0_i32_0 = arith.constant 0 : i32
    %c0_i32_1 = arith.constant 0 : i32
    return %c0_i32, %c0_i32_0 : i32, i32
  }
  func.func @transform_2(%arg0: i32, %arg1: i32) -> (i32, i32) {
    %c0_i32 = arith.constant 0 : i32
    %c0_i32_0 = arith.constant 0 : i32
    %c0_i32_1 = arith.constant 0 : i32
    return %c0_i32, %c0_i32_0 : i32, i32
  }
  func.func @transform_3(%arg0: i32, %arg1: i32) -> (i32, i32) {
    %c0_i32 = arith.constant 0 : i32
    %c0_i32_0 = arith.constant 0 : i32
    %c0_i32_1 = arith.constant 0 : i32
    return %c0_i32, %c0_i32_0 : i32, i32
  }
  func.func @transform_4(%arg0: i32, %arg1: i32) -> (i32, i32) {
    %c0_i32 = arith.constant 0 : i32
    %c0_i32_0 = arith.constant 0 : i32
    %c0_i32_1 = arith.constant 0 : i32
    return %c0_i32, %c0_i32_0 : i32, i32
  }
  func.func @transform_5(%arg0: i32, %arg1: i32) -> (i32, i32) {
    %c0_i32 = arith.constant 0 : i32
    %c0_i32_0 = arith.constant 0 : i32
    return %c0_i32, %arg1 : i32, i32
  }
  func.func @transform_6(%arg0: i32, %arg1: i32) -> (i32, i32) {
    %c0_i32 = arith.constant 0 : i32
    %c0_i32_0 = arith.constant 0 : i32
    return %c0_i32, %arg1 : i32, i32
  }
  func.func @transform_7(%arg0: i32, %arg1: i32) -> (i32, i32) {
    %c0_i32 = arith.constant 0 : i32
    return %arg0, %arg1 : i32, i32
  }
}

</mosaic_0001>

<llo_original>
// kernel: embed_reconstructor_forward.1
$region0: #{embed_reconstructor_forward.1}
  #allocation0 [shape = 'u32[]', space=smem, size = 0x4, offset = 0x4, fixed_abs, tag = 'smem constant byte address 0x4 - core index']
  #allocation1 [shape = 'u32[144,128]{1,0:T(1,128)}', space=vmem, size = 0x12000, scoped, tag = 'internal scratch']
  #allocation2 [shape = 'bf16[8,128]{1,0:T(8,128)(2,1)}', space=vmem, size = 0x800, scoped, tag = 'scratch operand']
  %s0 = inlined_call_operand.vmem [shape: f32[8,32], index: 0, kind: input, shape index: {}]
  %s1 = inlined_call_operand.vmem [shape: bf16[32,128], index: 1, kind: input, shape index: {}]
  %s2 = inlined_call_operand.vmem [shape: f32[1,128], index: 2, kind: input, shape index: {}]
  %s3 = inlined_call_operand.vmem [shape: bf16[128,128], index: 3, kind: input, shape index: {}]
  %s4 = inlined_call_operand.vmem [shape: f32[1,128], index: 4, kind: input, shape index: {}]
  %s5 = inlined_call_operand.vmem [shape: bf16[128,64], index: 5, kind: input, shape index: {}]
  %s6 = inlined_call_operand.vmem [shape: f32[1,64], index: 6, kind: input, shape index: {}]
  %s7 = inlined_call_operand.hbm [shape: f32[8,64], index: 7, kind: output, shape index: {}]
  %s8 = sld [smem:[#allocation0]]
  $region42: #{embed_reconstructor_forward.1} parent=0
    _
  %s10 = ssub.s32 1, %s8
  %s11 = scalar_select 0, %s10, %s8
  $region1: #{embed_reconstructor_forward.1} parent=0
    #allocation3 [shape = 'u8[4096]{0}', space=vmem, size = 0x1000, scoped, tag = 'output window, operand 0, single buffered']
    #allocation4 [shape = 's32[1]{0}', space=sflag, size = 0x4, scoped, tag = 'scoped memory for embed_reconstructor_forward.1']
    %12 = vsyncpa [#allocation4], 0
    // Predicated region
    $region2: #{embed_reconstructor_forward.1} parent=1 // pred_check
      _
    $region3: #{embed_reconstructor_forward.1} parent=1 // pred_check_branch
      %14 = sbr.rel (0) target = $region5
    $region4: #{embed_reconstructor_forward.1} parent=1 // pred_region
      _
    $region5: #{embed_reconstructor_forward.1} parent=1 // pred_fallthru
      _
    // Predicated region
    $region6: #{embed_reconstructor_forward.1} parent=1 // pred_check
      _
    $region7: #{embed_reconstructor_forward.1} parent=1 // pred_check_branch
      %16 = sbr.rel (0) target = $region9
    $region8: #{embed_reconstructor_forward.1} parent=1 // pred_region
      _
    $region9: #{embed_reconstructor_forward.1} parent=1 // pred_fallthru
      _
    // Predicated region
    $region10: #{embed_reconstructor_forward.1} parent=1 // pred_check
      _
    $region11: #{embed_reconstructor_forward.1} parent=1 // pred_check_branch
      %18 = sbr.rel (0) target = $region13
    $region12: #{embed_reconstructor_forward.1} parent=1 // pred_region
      _
    $region13: #{embed_reconstructor_forward.1} parent=1 // pred_fallthru
      _
    // Predicated region
    $region14: #{embed_reconstructor_forward.1} parent=1 // pred_check
      _
    $region15: #{embed_reconstructor_forward.1} parent=1 // pred_check_branch
      %20 = sbr.rel (0) target = $region17
    $region16: #{embed_reconstructor_forward.1} parent=1 // pred_region
      _
    $region17: #{embed_reconstructor_forward.1} parent=1 // pred_fallthru
      _
    // Predicated region
    $region18: #{embed_reconstructor_forward.1} parent=1 // pred_check
      _
    $region19: #{embed_reconstructor_forward.1} parent=1 // pred_check_branch
      %22 = sbr.rel (0) target = $region21
    $region20: #{embed_reconstructor_forward.1} parent=1 // pred_region
      _
    $region21: #{embed_reconstructor_forward.1} parent=1 // pred_fallthru
      _
    // Predicated region
    $region22: #{embed_reconstructor_forward.1} parent=1 // pred_check
      _
    $region23: #{embed_reconstructor_forward.1} parent=1 // pred_check_branch
      %24 = sbr.rel (0) target = $region25
    $region24: #{embed_reconstructor_forward.1} parent=1 // pred_region
      _
    $region25: #{embed_reconstructor_forward.1} parent=1 // pred_fallthru
      _
    // Predicated region
    $region26: #{embed_reconstructor_forward.1} parent=1 // pred_check
      _
    $region27: #{embed_reconstructor_forward.1} parent=1 // pred_check_branch
      %26 = sbr.rel (0) target = $region29
    $region28: #{embed_reconstructor_forward.1} parent=1 // pred_region
      _
    $region29: #{embed_reconstructor_forward.1} parent=1 // pred_fallthru
      _
    %p28 = scmp.eq.s32.totalorder 0, 0
    // Predicated region
    $region30: #{embed_reconstructor_forward.1} parent=1 // pred_check
      %p29 = pneg %p28
    $region31: #{embed_reconstructor_forward.1} parent=1 // pred_check_branch
      %31 = sbr.rel (%p29) target = $region33
    $region32: #{embed_reconstructor_forward.1} parent=1 // pred_region
      %v32 = vld [vmem:[%s0] sm:$0xff]
      %v33 = vpack.c.bf16 %v32, %v32
      %v34 = vld [vmem:[%s1] sm:$0xf]
      %v35 = vld [vmem:[%s1 + $0x4] sm:$0xf]
      %v36 = vld [vmem:[%s1 + $0x8] sm:$0xf]
      %v37 = vld [vmem:[%s1 + $0xc] sm:$0xf]
      %v38 = vld [vmem:[%s2] sm:$0x1]
      %v40 = vlaneseq
      %v41 = vshrl.u32 %v40, 7
      %v42 = vsub.s32 0, %v41
      %v43 = vrot.slane %v38, %v42
      %v49 = vunpack.c.l.b16 %v34
      %v50 = vunpack.c.l.b16 %v35
      %v51 = vunpack.c.l.b16 %v36
      %v52 = vunpack.c.l.b16 %v37
      %v53 = vpack.c.b16 %v50, %v49
      %v54 = vpack.c.b16 %v52, %v51
      %vm57 = vcmask 261120
      %v59 = vsel %vm57, %v33, 0
      %61 = vmatprep.subr.bf16.mxu0 0
      %62 = vmatpush1.bf16.msra.mxu0 %v53
      %63 = vmatprep.subr.bf16.mxu0 0
      %64 = vmatpush1.bf16.msra.mxu0 %v54
      %65 = vmatprep.subr.bf16.mxu0 0
      %66 = vmatpush1.bf16.msra.mxu0 0
      %67 = vmatprep.subr.bf16.mxu0 0
      %68 = vmatpush1.bf16.msra.mxu0 0
      %69 = vmatprep.subr.bf16.mxu0 0
      %70 = vmatpush1.bf16.msra.mxu0 0
      %71 = vmatprep.subr.bf16.mxu0 0
      %72 = vmatpush1.bf16.msra.mxu0 0
      %73 = vmatprep.subr.bf16.mxu0 0
      %74 = vmatpush1.bf16.msra.mxu0 0
      %75 = vmatprep.subr.bf16.mxu0 0
      %76 = vmatpush1.bf16.msra.mxu0 0
      %77 = vmatprep.subr.bf16.mxu0 0
      %78 = vmatpush1.bf16.msra.mxu0 0
      %79 = vmatprep.subr.bf16.mxu0 0
      %80 = vmatpush1.bf16.msra.mxu0 0
      %81 = vmatprep.subr.bf16.mxu0 0
      %82 = vmatpush1.bf16.msra.mxu0 0
      %83 = vmatprep.subr.bf16.mxu0 0
      %84 = vmatpush1.bf16.msra.mxu0 0
      %85 = vmatprep.subr.bf16.mxu0 0
      %86 = vmatpush1.bf16.msra.mxu0 0
      %87 = vmatprep.subr.bf16.mxu0 0
      %88 = vmatpush1.bf16.msra.mxu0 0
      %89 = vmatprep.subr.bf16.mxu0 0
      %90 = vmatpush1.bf16.msra.mxu0 0
      %91 = vmatprep.subr.bf16.mxu0 0
      %92 = vmatpush1.bf16.msra.mxu0 0
      %93 = vmatprep.mubr.bf16.mxu0 0
      %94 = vmatmul.mubr.bf16.gmra.mrb[0].mxu0 %v59
      %v95 = vpop.f32.mrb[0].mxu0
      %v96 = vadd.f32 %v43, %v95
      %v97 = vpop.f32.mrb[0].mxu0
      %v98 = vpop.f32.mrb[0].mxu0
      %v99 = vpop.f32.mrb[0].mxu0
      %100 = vdwg.mxu0
      %v101 = vmax.f32 %v96, 0.0
      %v102 = vpack.c.bf16 %v101, %v101
      %v103 = vld [vmem:[%s3] sm:$0xf]
      %v104 = vld [vmem:[%s3 + $0x4] sm:$0xf]
      %v105 = vld [vmem:[%s3 + $0x8] sm:$0xf]
      %v106 = vld [vmem:[%s3 + $0xc] sm:$0xf]
      %v107 = vld [vmem:[%s3 + $0x10] sm:$0xf]
      %v108 = vld [vmem:[%s3 + $0x14] sm:$0xf]
      %v109 = vld [vmem:[%s3 + $0x18] sm:$0xf]
      %v110 = vld [vmem:[%s3 + $0x1c] sm:$0xf]
      %v111 = vld [vmem:[%s3 + $0x20] sm:$0xf]
      %v112 = vld [vmem:[%s3 + $0x24] sm:$0xf]
      %v113 = vld [vmem:[%s3 + $0x28] sm:$0xf]
      %v114 = vld [vmem:[%s3 + $0x2c] sm:$0xf]
      %v115 = vld [vmem:[%s3 + $0x30] sm:$0xf]
      %v116 = vld [vmem:[%s3 + $0x34] sm:$0xf]
      %v117 = vld [vmem:[%s3 + $0x38] sm:$0xf]
      %v118 = vld [vmem:[%s3 + $0x3c] sm:$0xf]
      %v119 = vld [vmem:[%s4] sm:$0x1]
      %v121 = vlaneseq
      %v122 = vshrl.u32 %v121, 7
      %v123 = vsub.s32 0, %v122
      %v124 = vrot.slane %v119, %v123
      %v142 = vunpack.c.l.b16 %v103
      %v143 = vunpack.c.l.b16 %v104
      %v144 = vunpack.c.l.b16 %v105
      %v145 = vunpack.c.l.b16 %v106
      %v146 = vunpack.c.l.b16 %v107
      %v147 = vunpack.c.l.b16 %v108
      %v148 = vunpack.c.l.b16 %v109
      %v149 = vunpack.c.l.b16 %v110
      %v150 = vunpack.c.l.b16 %v111
      %v151 = vunpack.c.l.b16 %v112
      %v152 = vunpack.c.l.b16 %v113
      %v153 = vunpack.c.l.b16 %v114
      %v154 = vunpack.c.l.b16 %v115
      %v155 = vunpack.c.l.b16 %v116
      %v156 = vunpack.c.l.b16 %v117
      %v157 = vunpack.c.l.b16 %v118
      %v158 = vpack.c.b16 %v143, %v142
      %v159 = vpack.c.b16 %v145, %v144
      %v160 = vpack.c.b16 %v147, %v146
      %v161 = vpack.c.b16 %v149, %v148
      %v162 = vpack.c.b16 %v151, %v150
      %v163 = vpack.c.b16 %v153, %v152
      %v164 = vpack.c.b16 %v155, %v154
      %v165 = vpack.c.b16 %v157, %v156
      %174 = vmatprep.subr.bf16.mxu0 0
      %175 = vmatpush1.bf16.msra.mxu0 %v158
      %176 = vmatprep.subr.bf16.mxu0 0
      %177 = vmatpush1.bf16.msra.mxu0 %v159
      %178 = vmatprep.subr.bf16.mxu0 0
      %179 = vmatpush1.bf16.msra.mxu0 %v160
      %180 = vmatprep.subr.bf16.mxu0 0
      %181 = vmatpush1.bf16.msra.mxu0 %v161
      %182 = vmatprep.subr.bf16.mxu0 0
      %183 = vmatpush1.bf16.msra.mxu0 %v162
      %184 = vmatprep.subr.bf16.mxu0 0
      %185 = vmatpush1.bf16.msra.mxu0 %v163
      %186 = vmatprep.subr.bf16.mxu0 0
      %187 = vmatpush1.bf16.msra.mxu0 %v164
      %188 = vmatprep.subr.bf16.mxu0 0
      %189 = vmatpush1.bf16.msra.mxu0 %v165
      %190 = vmatprep.subr.bf16.mxu0 0
      %191 = vmatpush1.bf16.msra.mxu0 0
      %192 = vmatprep.subr.bf16.mxu0 0
      %193 = vmatpush1.bf16.msra.mxu0 0
      %194 = vmatprep.subr.bf16.mxu0 0
      %195 = vmatpush1.bf16.msra.mxu0 0
      %196 = vmatprep.subr.bf16.mxu0 0
      %197 = vmatpush1.bf16.msra.mxu0 0
      %198 = vmatprep.subr.bf16.mxu0 0
      %199 = vmatpush1.bf16.msra.mxu0 0
      %200 = vmatprep.subr.bf16.mxu0 0
      %201 = vmatpush1.bf16.msra.mxu0 0
      %202 = vmatprep.subr.bf16.mxu0 0
      %203 = vmatpush1.bf16.msra.mxu0 0
      %204 = vmatprep.subr.bf16.mxu0 0
      %205 = vmatpush1.bf16.msra.mxu0 0
      %206 = vmatprep.mubr.bf16.mxu0 0
      %207 = vmatmul.mubr.bf16.gmra.mrb[0].mxu0 %v102
      %v208 = vpop.f32.mrb[0].mxu0
      %v209 = vadd.f32 %v124, %v208
      %v210 = vpop.f32.mrb[0].mxu0
      %v211 = vpop.f32.mrb[0].mxu0
      %v212 = vpop.f32.mrb[0].mxu0
      %213 = vdwg.mxu0
      %v214 = vmax.f32 %v209, 0.0
      %v215 = vpack.c.bf16 %v214, %v214
      %216 = vst [vmem:[#allocation2] sm:$0xf] %v215
    $region33: #{embed_reconstructor_forward.1} parent=1 // pred_fallthru
      _
    %v217 = vld [vmem:[#allocation2] sm:$0xf]
    %v218 = vld [vmem:[%s5] sm:$0xf]
    %v219 = vld [vmem:[%s5 + $0x4] sm:$0xf]
    %v220 = vld [vmem:[%s5 + $0x8] sm:$0xf]
    %v221 = vld [vmem:[%s5 + $0xc] sm:$0xf]
    %v222 = vld [vmem:[%s5 + $0x10] sm:$0xf]
    %v223 = vld [vmem:[%s5 + $0x14] sm:$0xf]
    %v224 = vld [vmem:[%s5 + $0x18] sm:$0xf]
    %v225 = vld [vmem:[%s5 + $0x1c] sm:$0xf]
    %v226 = vld [vmem:[%s5 + $0x20] sm:$0xf]
    %v227 = vld [vmem:[%s5 + $0x24] sm:$0xf]
    %v228 = vld [vmem:[%s5 + $0x28] sm:$0xf]
    %v229 = vld [vmem:[%s5 + $0x2c] sm:$0xf]
    %v230 = vld [vmem:[%s5 + $0x30] sm:$0xf]
    %v231 = vld [vmem:[%s5 + $0x34] sm:$0xf]
    %v232 = vld [vmem:[%s5 + $0x38] sm:$0xf]
    %v233 = vld [vmem:[%s5 + $0x3c] sm:$0xf]
    %v234 = vld [vmem:[%s6] sm:$0x1]
    %v236 = vlaneseq
    %v237 = vshrl.u32 %v236, 7
    %v238 = vsub.s32 0, %v237
    %v239 = vrot.slane %v234, %v238
    %v257 = vunpack.c.l.b16 %v218
    %v258 = vunpack.c.l.b16 %v219
    %v259 = vunpack.c.l.b16 %v220
    %v260 = vunpack.c.l.b16 %v221
    %v261 = vunpack.c.l.b16 %v222
    %v262 = vunpack.c.l.b16 %v223
    %v263 = vunpack.c.l.b16 %v224
    %v264 = vunpack.c.l.b16 %v225
    %v265 = vunpack.c.l.b16 %v226
    %v266 = vunpack.c.l.b16 %v227
    %v267 = vunpack.c.l.b16 %v228
    %v268 = vunpack.c.l.b16 %v229
    %v269 = vunpack.c.l.b16 %v230
    %v270 = vunpack.c.l.b16 %v231
    %v271 = vunpack.c.l.b16 %v232
    %v272 = vunpack.c.l.b16 %v233
    %v273 = vpack.c.b16 %v258, %v257
    %v274 = vpack.c.b16 %v260, %v259
    %v275 = vpack.c.b16 %v262, %v261
    %v276 = vpack.c.b16 %v264, %v263
    %v277 = vpack.c.b16 %v266, %v265
    %v278 = vpack.c.b16 %v268, %v267
    %v279 = vpack.c.b16 %v270, %v269
    %v280 = vpack.c.b16 %v272, %v271
    %289 = vmatprep.subr.bf16.mxu0 0
    %290 = vmatpush1.bf16.msra.mxu0 %v273
    %291 = vmatprep.subr.bf16.mxu0 0
    %292 = vmatpush1.bf16.msra.mxu0 %v274
    %293 = vmatprep.subr.bf16.mxu0 0
    %294 = vmatpush1.bf16.msra.mxu0 %v275
    %295 = vmatprep.subr.bf16.mxu0 0
    %296 = vmatpush1.bf16.msra.mxu0 %v276
    %297 = vmatprep.subr.bf16.mxu0 0
    %298 = vmatpush1.bf16.msra.mxu0 %v277
    %299 = vmatprep.subr.bf16.mxu0 0
    %300 = vmatpush1.bf16.msra.mxu0 %v278
    %301 = vmatprep.subr.bf16.mxu0 0
    %302 = vmatpush1.bf16.msra.mxu0 %v279
    %303 = vmatprep.subr.bf16.mxu0 0
    %304 = vmatpush1.bf16.msra.mxu0 %v280
    %305 = vmatprep.subr.bf16.mxu0 0
    %306 = vmatpush1.bf16.msra.mxu0 0
    %307 = vmatprep.subr.bf16.mxu0 0
    %308 = vmatpush1.bf16.msra.mxu0 0
    %309 = vmatprep.subr.bf16.mxu0 0
    %310 = vmatpush1.bf16.msra.mxu0 0
    %311 = vmatprep.subr.bf16.mxu0 0
    %312 = vmatpush1.bf16.msra.mxu0 0
    %313 = vmatprep.subr.bf16.mxu0 0
    %314 = vmatpush1.bf16.msra.mxu0 0
    %315 = vmatprep.subr.bf16.mxu0 0
    %316 = vmatpush1.bf16.msra.mxu0 0
    %317 = vmatprep.subr.bf16.mxu0 0
    %318 = vmatpush1.bf16.msra.mxu0 0
    %319 = vmatprep.subr.bf16.mxu0 0
    %320 = vmatpush1.bf16.msra.mxu0 0
    %321 = vmatprep.mubr.bf16.mxu0 0
    %322 = vmatmul.mubr.bf16.gmra.mrb[0].mxu0 %v217
    %v323 = vpop.f32.mrb[0].mxu0
    %v324 = vadd.f32 %v239, %v323
    %v325 = vpop.f32.mrb[0].mxu0
    %v326 = vpop.f32.mrb[0].mxu0
    %v327 = vpop.f32.mrb[0].mxu0
    %328 = vdwg.mxu0
    %vm329 = vcmask 523264
    %330 = vst.msk [vmem:[#allocation3] sm:$0xff] %vm329, %v324
    // Predicated region
    $region34: #{embed_reconstructor_forward.1} parent=1 // pred_check
      _
    $region35: #{embed_reconstructor_forward.1} parent=1 // pred_check_branch
      %332 = sbr.rel (0) target = $region37
    $region36: #{embed_reconstructor_forward.1} parent=1 // pred_region
      %s334 = ssub.s32 128, 128
      %335 = vsyncadd [#allocation4], %s334
      %s337 = sshll.u32 [#allocation3], 4
      %s338 = int_to_ptr.vmem [resolvable:$true] %s337
      %340 = dma.vmem_to_hbm [thread:$0]  %s338, 128, %s7, [#allocation4]
    $region37: #{embed_reconstructor_forward.1} parent=1 // pred_fallthru
      _
    // Predicated region
    $region38: #{embed_reconstructor_forward.1} parent=1 // pred_check
      _
    $region39: #{embed_reconstructor_forward.1} parent=1 // pred_check_branch
      %342 = sbr.rel (0) target = $region41
    $region40: #{embed_reconstructor_forward.1} parent=1 // pred_region
      %343 = dma.done [#allocation4], 128
    $region41: #{embed_reconstructor_forward.1} parent=1 // pred_fallthru
      _
    %344 = vsyncpa [#allocation4], 1

</llo_original>
